<compile_context>
chip_gen: v5e
topology: v5e:2x2
jax: 0.10.0
libtpu: 0.0.40
codegen_flags: <defaults>
</compile_context>

<pallas_src>
import functools

import jax
import jax.numpy as jnp
from jax.experimental import pallas as pl
from jax.experimental.pallas import tpu as pltpu

_LANE = 128
_MAX_T_HW = 128 * 1024                  # lane-tile cap along H*W
_MAX_INPUT_BUFFERS = 3                  # deepest input pipelining we request
_VMEM_BUDGET = 12 * 1024 * 1024         # input-stream VMEM budget (all gens)


def _round_up(x, m):
    return (x + m - 1) // m * m


def _l_color_sum_kernel(x_ref, out_ref, *, hw, t_hw, n_hw_per_super, needs_mask):
    """Accumulates per-row (= per batch*channel) spatial sums.

    x_ref:   (row_block, t_hw) tile of the (B*3, H*W) input (lane-dense).
    out_ref: (1, row_block, 1) f32 block, resident across the hw grid axis
             (its block index is constant in j) -> acts as the accumulator and
             is written back to HBM once per (row_block, super) pair.
    """
    s = pl.program_id(1)                 # super-chunk index (parallel)
    j = pl.program_id(2)                 # reduction step within the chunk

    @pl.when(j == 0)
    def _init():
        out_ref[...] = jnp.zeros_like(out_ref)

    xf = x_ref[...].astype(jnp.float32)
    if needs_mask:
        # Global element offset of this tile along H*W.  Mask out-of-range
        # lanes (ragged tail / clamped duplicate block): Pallas does not zero
        # partial-block reads, so this is required for correctness.
        start = (s * n_hw_per_super + j) * t_hw
        rem = hw - start                               # may be <= 0 for dups
        lane = jax.lax.broadcasted_iota(jnp.int32, xf.shape, 1)
        xf = jnp.where(lane < rem, xf, 0.0)

    # One cross-lane reduce per step (XLU), accumulated into the tiny
    # output-resident buffer.  All accumulation is in f32.
    out_ref[...] += jnp.sum(xf, axis=-1, keepdims=True)[None]


def l_color(x):
    """Color-constancy loss; semantics identical to the PyTorch L_color module.

    x: (B, 3, H, W) array (NCHW).  Returns (B, 1, 1, 1) in x.dtype.
    """
    b, c, h, w = x.shape
    assert c == 3, "L_color expects a 3-channel (RGB) input"
    hw = h * w
    rows = b * c
    itemsize = x.dtype.itemsize

    # Free reshape: fold channels into the row (sublane) axis and the spatial
    # dims into the lane-dense streaming axis.  No padding / copying.
    x2d = x.reshape(rows, hw)

    # --- row blocking (sublane axis) -----------------------------------
    if rows <= 1024:
        row_block = rows                 # block == full dim -> any size is ok
    else:
        row_block = 512                  # multiple of 8 (f32) and 16 (bf16)
    n_row_blocks = pl.cdiv(rows, row_block)
    rows_out = n_row_blocks * row_block  # tiny output over-alloc; sliced off

    # --- H*W tiling (lane axis), sized for the VMEM budget --------------
    t_hw = min(
        _MAX_T_HW,
        _VMEM_BUDGET // (row_block * _MAX_INPUT_BUFFERS * itemsize),
        _round_up(hw, _LANE),
    )
    t_hw = max(_LANE, t_hw // _LANE * _LANE)
    n_hw_total = pl.cdiv(hw, t_hw)

    # --- split the reduction into parallel super-chunks (v7x: 2 TCs) ----
    # Only when it costs no (or negligible) duplicate HBM traffic on
    # single-TC chips.
    if n_hw_total >= 2 and (n_hw_total % 2 == 0 or n_hw_total >= 16):
        n_super = 2
    else:
        n_super = 1
    n_hw_per_super = pl.cdiv(n_hw_total, n_super)
    has_dup = n_super * n_hw_per_super != n_hw_total
    needs_mask = (hw % t_hw != 0) or has_dup

    if has_dup:
        # Clamp so no block is ever fully out of bounds; the kernel mask
        # zeroes the duplicate block's contribution.
        def x_index(r, s, j):
            return (r, jnp.minimum(s * n_hw_per_super + j, n_hw_total - 1))
    else:
        def x_index(r, s, j):
            return (r, s * n_hw_per_super + j)

    if n_hw_per_super >= 3:
        # Deeper input pipelining once the streaming loop is long enough.
        x_spec = pl.BlockSpec((row_block, t_hw), x_index,
                              pipeline_mode=pl.Buffered(3))
    else:
        x_spec = pl.BlockSpec((row_block, t_hw), x_index)

    kernel = functools.partial(
        _l_color_sum_kernel,
        hw=hw, t_hw=t_hw, n_hw_per_super=n_hw_per_super, needs_mask=needs_mask)

    partial = pl.pallas_call(
        kernel,
        out_shape=jax.ShapeDtypeStruct((n_super, rows_out, 1), jnp.float32),
        grid_spec=pltpu.PrefetchScalarGridSpec(
            num_scalar_prefetch=0,
            grid=(n_row_blocks, n_super, n_hw_per_super),
            in_specs=[x_spec],
            out_specs=pl.BlockSpec((1, row_block, 1),
                                   lambda r, s, j: (s, r, 0)),
        ),
        compiler_params=pltpu.CompilerParams(
            dimension_semantics=("parallel", "parallel", "arbitrary"),
            vmem_limit_bytes=32 * 1024 * 1024,
        ),
        cost_estimate=pl.CostEstimate(
            flops=2 * rows * hw,
            transcendentals=0,
            bytes_accessed=rows * hw * itemsize + n_super * rows_out * 4,
        ),
    )(x2d)

    # Tiny epilogue on B*3 scalars: combine super-chunk partial sums, means, k.
    sums = jnp.sum(partial[:, :rows, 0], axis=0)          # (B*3,), f32
    mean_rgb = (sums * (1.0 / hw)).reshape(b, 3)
    mr, mg, mb = mean_rgb[:, 0], mean_rgb[:, 1], mean_rgb[:, 2]
    drg = (mr - mg) ** 2
    drb = (mr - mb) ** 2
    dgb = (mb - mg) ** 2
    k = jnp.sqrt(drg ** 2 + drb ** 2 + dgb ** 2)
    return k.reshape(b, 1, 1, 1).astype(x.dtype)


def _l_color_ref(x):
    mean_rgb = jnp.mean(x.astype(jnp.float32), axis=(2, 3), keepdims=True)
    mr = mean_rgb[:, 0:1]
    mg = mean_rgb[:, 1:2]
    mb = mean_rgb[:, 2:3]
    drg = (mr - mg) ** 2
    drb = (mr - mb) ** 2
    dgb = (mb - mg) ** 2
    return jnp.sqrt(drg ** 2 + drb ** 2 + dgb ** 2).astype(x.dtype)


def _make_input(key, shape, dtype=jnp.float32):
    # Distinct per-channel offsets make k O(0.1) so the check is meaningful.
    x = jax.random.uniform(key, shape, dtype=dtype)
    offs = jnp.asarray([0.0, 0.1, 0.3], dtype=dtype).reshape(1, 3, 1, 1)
    return x + offs


if __name__ == "__main__":
    # Primary case: B=2, C=3 (RGB), 16x16 spatial (aligned H*W, single tile).
    x = _make_input(jax.random.PRNGKey(0), (2, 3, 16, 16))
    out = jax.block_until_ready(l_color(x))
    ref = _l_color_ref(x)
    assert out.shape == (2, 1, 1, 1), out.shape
    assert jnp.allclose(out, ref, rtol=1e-4, atol=1e-6), (out, ref)

    # Ragged spatial extent: exercises the in-kernel tail-mask path
    # (no jnp.pad copy of the input).
    x2 = _make_input(jax.random.PRNGKey(1), (2, 3, 20, 30))
    out2 = jax.block_until_ready(l_color(x2))
    ref2 = _l_color_ref(x2)
    assert jnp.allclose(out2, ref2, rtol=1e-4, atol=1e-6), (out2, ref2)

    # Larger spatial extent: exercises the 2-way super-chunk split of the
    # H*W reduction (partial sums combined in the wrapper) plus masking.
    x3 = _make_input(jax.random.PRNGKey(2), (1, 3, 300, 300))
    out3 = jax.block_until_ready(l_color(x3))
    ref3 = _l_color_ref(x3)
    assert jnp.allclose(out3, ref3, rtol=1e-4, atol=1e-6), (out3, ref3)

    print("KERNEL_OK")
</pallas_src>

<mosaic_0001>
module attributes {stable_mosaic.version = 11 : i64} {
  func.func @_l_color_sum_kernel(%arg0: i32, %arg1: i32, %arg2: i32, %arg3: memref<6x256xf32, #tpu.memory_space<vmem>>, %arg4: memref<1x6x1xf32, #tpu.memory_space<vmem>>) attributes {dimension_semantics = [#tpu.dimension_semantics<parallel>, #tpu.dimension_semantics<parallel>, #tpu.dimension_semantics<arbitrary>], iteration_bounds = array<i64: 1, 1, 1>, scalar_prefetch = 0 : i64, scratch_operands = 0 : i64, tpu.core_type = #tpu.core_type<tc>, window_params = [{transform_indices = @transform_0, window_bounds = array<i64: 6, 256>}, {transform_indices = @transform_1, window_bounds = array<i64: 1, 6, 1>}]} {
    %c0_i32 = arith.constant 0 : i32
    %0 = arith.cmpi eq, %arg2, %c0_i32 : i32
    %1 = arith.extui %0 : i1 to i32
    %c0_i32_0 = arith.constant 0 : i32
    %2 = arith.cmpi ne, %1, %c0_i32_0 : i32
    scf.if %2 {
      %cst_8 = arith.constant 0.000000e+00 : f32
      %10 = vector.broadcast %cst_8 : f32 to vector<1x6x1xf32>
      %c0_9 = arith.constant 0 : index
      %c0_10 = arith.constant 0 : index
      %c0_11 = arith.constant 0 : index
      %11 = vector.load %arg4[%c0_9, %c0_10, %c0_11] : memref<1x6x1xf32, #tpu.memory_space<vmem>>, vector<1x6x1xf32>
      tpu.vector_store %arg4[%c0_9, %c0_10, %c0_11], %10 {strides = array<i32>} : memref<1x6x1xf32, #tpu.memory_space<vmem>>, vector<1x6x1xf32>,
    } else {
    }
    %c0 = arith.constant 0 : index
    %c0_1 = arith.constant 0 : index
    %3 = vector.load %arg3[%c0, %c0_1] : memref<6x256xf32, #tpu.memory_space<vmem>>, vector<6x256xf32>
    %c0_2 = arith.constant 0 : index
    %c0_3 = arith.constant 0 : index
    %c0_4 = arith.constant 0 : index
    %4 = vector.load %arg4[%c0_2, %c0_3, %c0_4] : memref<1x6x1xf32, #tpu.memory_space<vmem>>, vector<1x6x1xf32>
    %cst = arith.constant dense<0.000000e+00> : vector<6xf32>
    %5 = vector.multi_reduction <add>, %3, %cst [1] : vector<6x256xf32> to vector<6xf32>
    %6 = vector.shape_cast %5 : vector<6xf32> to vector<6x1xf32>
    %7 = vector.shape_cast %6 : vector<6x1xf32> to vector<1x6x1xf32>
    %8 = arith.addf %4, %7 : vector<1x6x1xf32>
    %c0_5 = arith.constant 0 : index
    %c0_6 = arith.constant 0 : index
    %c0_7 = arith.constant 0 : index
    %9 = vector.load %arg4[%c0_5, %c0_6, %c0_7] : memref<1x6x1xf32, #tpu.memory_space<vmem>>, vector<1x6x1xf32>
    tpu.vector_store %arg4[%c0_5, %c0_6, %c0_7], %8 {strides = array<i32>} : memref<1x6x1xf32, #tpu.memory_space<vmem>>, vector<1x6x1xf32>,
    return
  }
  func.func @transform_0(%arg0: i32, %arg1: i32, %arg2: i32) -> (i32, i32) {
    %c1_i32 = arith.constant 1 : i32
    %0 = arith.muli %arg1, %c1_i32 : i32
    %1 = arith.addi %0, %arg2 : i32
    %c0_i32 = arith.constant 0 : i32
    return %arg0, %1 : i32, i32
  }
  func.func @transform_1(%arg0: i32, %arg1: i32, %arg2: i32) -> (i32, i32, i32) {
    %c0_i32 = arith.constant 0 : i32
    %c0_i32_0 = arith.constant 0 : i32
    return %arg1, %arg0, %c0_i32 : i32, i32, i32
  }
}

</mosaic_0001>

<llo_original>
// kernel: tpu_custom_call.1
$region0: #{tpu_custom_call.1}
  #allocation0 [shape = 'u32[]', space=smem, size = 0x4, offset = 0x4, fixed_abs, tag = 'smem constant byte address 0x4 - core index']
  #allocation1 [shape = 'u32[72,128]{1,0:T(1,128)}', space=vmem, size = 0x9000, scoped, tag = 'internal scratch']
  %s0 = inlined_call_operand.hbm [shape: f32[6,256], index: 0, kind: input, shape index: {}]
  %s1 = inlined_call_operand.vmem [shape: f32[1,6,1], index: 1, kind: output, shape index: {}]
  %s2 = sld [smem:[#allocation0]]
  $region22: #{tpu_custom_call.1} parent=0
    _
  %s4 = ssub.s32 1, %s2
  %s5 = scalar_select 0, %s4, %s2
  $region1: #{tpu_custom_call.1} parent=0
    #allocation2 [shape = 'u8[8192]{0}', space=vmem, size = 0x2000, scoped, tag = 'input window, operand 0, single buffered']
    #allocation3 [shape = 's32[1]{0}', space=sflag, size = 0x4, scoped, tag = 'scoped memory for tpu_custom_call.1']
    %6 = vsyncpa [#allocation3], 0
    // Predicated region
    $region2: #{tpu_custom_call.1} parent=1 // pred_check
      _
    $region3: #{tpu_custom_call.1} parent=1 // pred_check_branch
      %8 = sbr.rel (0) target = $region5
    $region4: #{tpu_custom_call.1} parent=1 // pred_region
      %s9 = sadd.s32 0, 0
      %s10 = smul.u32 2, %s9
      %12 = vsyncadd [#allocation3], 0
      %s13 = smul.addr %s10, 8
      %s14 = scalar_lea.hbm %s0, %s13
      %s16 = sshll.u32 %s14, 4
      %s17 = int_to_ptr.hbm [resolvable:$true] %s16
      %s18 = sshll.u32 [#allocation2], 4
      %s19 = int_to_ptr.vmem [resolvable:$true] %s18
      %21 = dma.hbm_to_vmem [thread:$0]  %s17, 256, %s19, [#allocation3]
    $region5: #{tpu_custom_call.1} parent=1 // pred_fallthru
      _
    // Predicated region
    $region6: #{tpu_custom_call.1} parent=1 // pred_check
      _
    $region7: #{tpu_custom_call.1} parent=1 // pred_check_branch
      %23 = sbr.rel (0) target = $region9
    $region8: #{tpu_custom_call.1} parent=1 // pred_region
      %25 = dma.done [#allocation3], 256
    $region9: #{tpu_custom_call.1} parent=1 // pred_fallthru
      _
    %s26 = sadd.s32 0, 0
    %s27 = smul.u32 2, %s26
    %p28 = scmp.eq.s32.totalorder 0, 0
    // Predicated region
    $region10: #{tpu_custom_call.1} parent=1 // pred_check
      %p29 = pneg %p28
    $region11: #{tpu_custom_call.1} parent=1 // pred_check_branch
      %31 = sbr.rel (%p29) target = $region13
    $region12: #{tpu_custom_call.1} parent=1 // pred_region
      %vm32 = vcmask 5120
      %33 = vst.msk [vmem:[%s1] sm:$0x3f] %vm32, 0.0
    $region13: #{tpu_custom_call.1} parent=1 // pred_fallthru
      _
    %v34 = vld [vmem:[#allocation2] sm:$0x3f]
    %v35 = vld [vmem:[#allocation2 + $0x8] sm:$0x3f]
    %v36 = vld [vmem:[%s1] sm:$0x3f]
    %vm37 = vcmask 1045504
    %v38 = vsel %vm37, %v34, 0.0
    %v39 = vsel %vm37, %v35, 0.0
    %v40 = vadd.f32 %v38, %v39
    %41 = vadd.xlane.f32.xlu0 %v40
    %v42 = vpop.xlane.xlu0 %41
    %v43 = vadd.f32 %v36, %v42
    %vm44 = vcmask 5120
    %45 = vst.msk [vmem:[%s1] sm:$0x3f] %vm44, %v43
    // Predicated region
    $region14: #{tpu_custom_call.1} parent=1 // pred_check
      _
    $region15: #{tpu_custom_call.1} parent=1 // pred_check_branch
      %47 = sbr.rel (0) target = $region17
    $region16: #{tpu_custom_call.1} parent=1 // pred_region
      _
    $region17: #{tpu_custom_call.1} parent=1 // pred_fallthru
      _
    // Predicated region
    $region18: #{tpu_custom_call.1} parent=1 // pred_check
      _
    $region19: #{tpu_custom_call.1} parent=1 // pred_check_branch
      %49 = sbr.rel (0) target = $region21
    $region20: #{tpu_custom_call.1} parent=1 // pred_region
      _
    $region21: #{tpu_custom_call.1} parent=1 // pred_fallthru
      _
    %50 = vsyncpa [#allocation3], 1

</llo_original>
